<compile_context>
chip_gen: v6e
topology: v6e:2x2x1
jax: 0.10.0
libtpu: 0.0.40
codegen_flags: <defaults>
</compile_context>

<pallas_src>
from functools import partial

import jax
import jax.numpy as jnp
from jax.experimental import pallas as pl
from jax.experimental.pallas import tpu as pltpu

_LANE = 128


def _round_up(v, m):
    return ((v + m - 1) // m) * m


def _pick_tile(dim_p, *, max_tile=512, min_tiles=1):
    """Largest tile in {512, 256, 128} dividing dim_p with >= min_tiles tiles."""
    for t in (512, 256, 128):
        if t <= max_tile and dim_p % t == 0 and dim_p // t >= min_tiles:
            return t
    return dim_p


def _vmem_limit_bytes():
    """~3/4 of physical VMEM: ~48 MiB on v7x, ~96 MiB on v5e/v6e (safe fallback 48 MiB)."""
    try:
        cap = int(pltpu.get_tpu_info().vmem_capacity_bytes)
    except Exception:
        cap = 64 * 1024 * 1024
    return max(32 * 1024 * 1024, min(cap * 3 // 4, 100 * 1024 * 1024))


def _pad2(a, rows, cols, dtype):
    """Cast + zero-pad a 2-D array to (rows, cols); cheap no-op when already aligned."""
    if a.shape != (rows, cols):
        out = jnp.zeros((rows, cols), dtype)
        return out.at[: a.shape[0], : a.shape[1]].set(a.astype(dtype))
    return a.astype(dtype)


# --------------------------------------------------------------------------------------
# Kernel bodies
# --------------------------------------------------------------------------------------
def _dropout_epilogue(h, dropout_p, training, seed_ref):
    """Inverted dropout (matches F.dropout with training=True); identity otherwise."""
    if not (training and dropout_p > 0.0):
        return h
    if dropout_p >= 1.0:
        return jnp.zeros_like(h)
    pltpu.prng_seed(seed_ref[0] + pl.program_id(0))
    bits = pltpu.bitcast(pltpu.prng_random_bits(h.shape), jnp.uint32)
    thresh = jnp.uint32(min(int(dropout_p * 4294967296.0), 4294967295))
    keep = bits >= thresh
    return jnp.where(keep, h * (1.0 / (1.0 - dropout_p)), jnp.zeros_like(h))


# Phase 0 (unfused path): support = x @ W, tiled over (rows, W output columns).
def _support_kernel(x_ref, w_ref, o_ref):
    o_ref[...] = jnp.dot(
        x_ref[...], w_ref[...], preferred_element_type=jnp.float32
    ).astype(o_ref.dtype)


# Phase 1 (unfused): h = dropout(relu(adj @ support + b)); reduction axis last.
def _gcn_kernel(dropout_p, training,
                seed_ref, adj_ref, sup_ref, bias_ref, h_ref, acc_ref):
    k = pl.program_id(1)

    @pl.when(k == 0)
    def _():
        acc_ref[...] = jnp.zeros_like(acc_ref)

    acc_ref[...] += jnp.dot(
        adj_ref[...], sup_ref[...], preferred_element_type=jnp.float32)

    @pl.when(k == pl.num_programs(1) - 1)
    def _():
        h = jnp.maximum(acc_ref[...] + bias_ref[...], 0.0)
        h = _dropout_epilogue(h, dropout_p, training, seed_ref)
        h_ref[...] = h.astype(h_ref.dtype)


# Phase 1 (fused, nhid_p <= tm): support k-slab computed on the fly (W resident).
def _gcn_fused_kernel(dropout_p, training,
                      seed_ref, adj_ref, x_ref, w_ref, bias_ref, h_ref, acc_ref):
    k = pl.program_id(1)

    @pl.when(k == 0)
    def _():
        acc_ref[...] = jnp.zeros_like(acc_ref)

    sup = jnp.dot(
        x_ref[...], w_ref[...], preferred_element_type=jnp.float32
    ).astype(jnp.bfloat16)
    acc_ref[...] += jnp.dot(adj_ref[...], sup, preferred_element_type=jnp.float32)

    @pl.when(k == pl.num_programs(1) - 1)
    def _():
        h = jnp.maximum(acc_ref[...] + bias_ref[...], 0.0)
        h = _dropout_epilogue(h, dropout_p, training, seed_ref)
        h_ref[...] = h.astype(h_ref.dtype)


# Phase 2: out[i, j] = h[i-slab] @ h[j-slab].T via dot_general contracting last dims
# (transpose folded into the MXU operand feed; no XLU vxpose, lane-dense output tiles).
def _gram_kernel(hi_ref, hj_ref, o_ref):
    o_ref[...] = jax.lax.dot_general(
        hi_ref[...], hj_ref[...],
        dimension_numbers=(((1,), (1,)), ((), ())),
        preferred_element_type=jnp.float32,
    )


# --------------------------------------------------------------------------------------
# Wrapper
# --------------------------------------------------------------------------------------
def structure_decoder(x, adj, weight, bias, *, dropout=0.0, training=False, seed=0):
    """Pallas implementation of Structure_Decoder.forward(x, adj)."""
    n, nhid = x.shape
    assert adj.shape == (n, n)
    assert weight.shape == (nhid, nhid)
    assert bias.shape == (nhid,)

    # Pad to lane-dense multiples of 128.  Padded W columns / bias entries are zero,
    # so padded feature columns of h are exactly 0 and do not perturb the Gram matrix;
    # padded rows only affect out rows/cols that are sliced away.
    n_p = _round_up(n, _LANE)
    nhid_p = _round_up(nhid, _LANE)

    tm = _pick_tile(n_p, min_tiles=2)   # row tile ("parallel"; keep >= 2 tiles for v7x)
    tk = _pick_tile(n_p)                # reduction tile over adj columns
    tn = _pick_tile(n_p)                # Gram lane (output column) tile
    tn0 = _pick_tile(nhid_p)            # W output-column tile (unfused phase 0)

    vmem_limit = _vmem_limit_bytes()

    x_p = _pad2(x, n_p, nhid_p, jnp.bfloat16)
    w_p = _pad2(weight, nhid_p, nhid_p, jnp.bfloat16)
    adj_p = _pad2(adj, n_p, n_p, jnp.bfloat16)
    bias_p = _pad2(bias.reshape(1, -1), 1, nhid_p, jnp.float32)
    seed_arr = jnp.array([seed], dtype=jnp.int32)

    gcn_out_shape = jax.ShapeDtypeStruct((n_p, nhid_p), jnp.bfloat16)
    fuse = nhid_p <= tm  # recompute of x@W per row tile is cheap -> fuse phases 0+1

    if fuse:
        gcn_kernel = partial(_gcn_fused_kernel, float(dropout), bool(training))
        h = pl.pallas_call(
            gcn_kernel,
            out_shape=gcn_out_shape,
            grid_spec=pltpu.PrefetchScalarGridSpec(
                num_scalar_prefetch=1,                      # dropout seed in SMEM
                grid=(n_p // tm, n_p // tk),                # rows parallel, red. last
                in_specs=[
                    pl.BlockSpec((tm, tk), lambda i, k, s: (i, k)),          # adj tile
                    pl.BlockSpec((tk, nhid_p), lambda i, k, s: (k, 0)),      # x k-slab
                    pl.BlockSpec((nhid_p, nhid_p), lambda i, k, s: (0, 0)),  # W (resident)
                    pl.BlockSpec((1, nhid_p), lambda i, k, s: (0, 0)),       # bias
                ],
                out_specs=pl.BlockSpec((tm, nhid_p), lambda i, k, s: (i, 0)),
                scratch_shapes=[pltpu.VMEM((tm, nhid_p), jnp.float32)],      # f32 acc
            ),
            compiler_params=pltpu.CompilerParams(
                dimension_semantics=("parallel", "arbitrary"),
                vmem_limit_bytes=vmem_limit),
            cost_estimate=pl.CostEstimate(
                flops=2 * n_p * n_p * nhid_p
                      + (n_p // tm) * 2 * n_p * nhid_p * nhid_p,
                transcendentals=0,
                bytes_accessed=2 * n_p * n_p
                               + (n_p // tm) * 2 * n_p * nhid_p     # x slab re-reads
                               + 2 * nhid_p * nhid_p                # W
                               + 2 * n_p * nhid_p),                 # h write
        )(seed_arr, adj_p, x_p, w_p, bias_p)
    else:
        # ---- Phase 0: support = x @ W (rows x W-column tiles; no full-W residency) ----
        support = pl.pallas_call(
            _support_kernel,
            out_shape=jax.ShapeDtypeStruct((n_p, nhid_p), jnp.bfloat16),
            grid_spec=pl.GridSpec(
                grid=(n_p // tm, nhid_p // tn0),
                in_specs=[
                    pl.BlockSpec((tm, nhid_p), lambda i, j: (i, 0)),   # x row slab
                    pl.BlockSpec((nhid_p, tn0), lambda i, j: (0, j)),  # W column slab
                ],
                out_specs=pl.BlockSpec((tm, tn0), lambda i, j: (i, j)),
            ),
            compiler_params=pltpu.CompilerParams(
                dimension_semantics=("parallel", "parallel"),
                vmem_limit_bytes=vmem_limit),
            cost_estimate=pl.CostEstimate(
                flops=2 * n_p * nhid_p * nhid_p,
                transcendentals=0,
                bytes_accessed=(nhid_p // tn0) * 2 * n_p * nhid_p
                               + (n_p // tm) * 2 * nhid_p * nhid_p
                               + 2 * n_p * nhid_p),
        )(x_p, w_p)

        # ---- Phase 1: h = dropout(relu(adj @ support + b)) ---------------------------
        gcn_kernel = partial(_gcn_kernel, float(dropout), bool(training))
        h = pl.pallas_call(
            gcn_kernel,
            out_shape=gcn_out_shape,
            grid_spec=pltpu.PrefetchScalarGridSpec(
                num_scalar_prefetch=1,
                grid=(n_p // tm, n_p // tk),
                in_specs=[
                    pl.BlockSpec((tm, tk), lambda i, k, s: (i, k)),        # adj tile
                    pl.BlockSpec((tk, nhid_p), lambda i, k, s: (k, 0)),    # support slab
                    pl.BlockSpec((1, nhid_p), lambda i, k, s: (0, 0)),     # bias
                ],
                out_specs=pl.BlockSpec((tm, nhid_p), lambda i, k, s: (i, 0)),
                scratch_shapes=[pltpu.VMEM((tm, nhid_p), jnp.float32)],
            ),
            compiler_params=pltpu.CompilerParams(
                dimension_semantics=("parallel", "arbitrary"),
                vmem_limit_bytes=vmem_limit),
            cost_estimate=pl.CostEstimate(
                flops=2 * n_p * n_p * nhid_p,
                transcendentals=0,
                bytes_accessed=2 * n_p * n_p
                               + (n_p // tm) * 2 * n_p * nhid_p     # support re-reads
                               + 2 * n_p * nhid_p),
        )(seed_arr, adj_p, support, bias_p)

    # ---- Phase 2: out = h @ h.T (last-dim contraction; wide lane-dense output tiles) --
    out_p = pl.pallas_call(
        _gram_kernel,
        out_shape=jax.ShapeDtypeStruct((n_p, n_p), jnp.float32),
        grid_spec=pl.GridSpec(
            grid=(n_p // tm, n_p // tn),
            in_specs=[
                pl.BlockSpec((tm, nhid_p), lambda i, j: (i, 0)),   # h row slab i
                pl.BlockSpec((tn, nhid_p), lambda i, j: (j, 0)),   # h row slab j
            ],
            out_specs=pl.BlockSpec((tm, tn), lambda i, j: (i, j)),
        ),
        compiler_params=pltpu.CompilerParams(
            dimension_semantics=("parallel", "parallel"),
            vmem_limit_bytes=vmem_limit),
        cost_estimate=pl.CostEstimate(
            flops=2 * n_p * n_p * nhid_p,
            transcendentals=0,
            bytes_accessed=(n_p // tn) * 2 * n_p * nhid_p          # hi re-reads
                           + (n_p // tm) * 2 * n_p * nhid_p        # hj re-reads
                           + 4 * n_p * n_p),
    )(h, h)

    return out_p[:n, :n]


# --------------------------------------------------------------------------------------
# Reference + demo
# --------------------------------------------------------------------------------------
def _reference(x, adj, weight, bias):
    # Pure-JAX reference mirroring the kernel's bf16-operand / f32-accumulate numerics
    # (eval mode: dropout = identity).
    xb = x.astype(jnp.bfloat16)
    wb = weight.astype(jnp.bfloat16)
    ab = adj.astype(jnp.bfloat16)
    support = jnp.dot(xb, wb, preferred_element_type=jnp.float32).astype(jnp.bfloat16)
    h = jnp.maximum(
        jnp.dot(ab, support, preferred_element_type=jnp.float32) + bias[None, :], 0.0)
    hb = h.astype(jnp.bfloat16)
    return jax.lax.dot_general(hb, hb, (((1,), (1,)), ((), ())),
                               preferred_element_type=jnp.float32)


def _make_inputs(key, n, nhid):
    kx, kadj, kw, kb = jax.random.split(key, 4)
    # Kipf-style uniform(-1/sqrt(nhid), 1/sqrt(nhid)) parameter init.
    stdv = 1.0 / jnp.sqrt(jnp.float32(nhid))
    weight = jax.random.uniform(kw, (nhid, nhid), jnp.float32, -stdv, stdv)
    bias = jax.random.uniform(kb, (nhid,), jnp.float32, -stdv, stdv)
    # Node features + symmetric row-normalized adjacency.
    x = jax.random.normal(kx, (n, nhid), jnp.float32)
    a = (jax.random.uniform(kadj, (n, n), jnp.float32) > 0.5).astype(jnp.float32)
    a = a + a.T + jnp.eye(n, dtype=jnp.float32)
    adj = a / jnp.sum(a, axis=1, keepdims=True)
    return x, adj, weight, bias


if __name__ == "__main__":
    key = jax.random.PRNGKey(0)
    k1, k2 = jax.random.split(key)

    # Case 1: nhid_p <= tm -> fused path (x @ W folded into the adj-reduction kernel).
    x, adj, w, b = _make_inputs(k1, 16, 32)
    out = jax.block_until_ready(
        structure_decoder(x, adj, w, b, dropout=0.3, training=False, seed=0))
    ref = _reference(x, adj, w, b)
    assert out.shape == (16, 16)
    assert jnp.allclose(out, ref, atol=1e-2, rtol=1e-2), "mismatch (fused path)"

    # Case 2: nhid_p > tm -> separate support kernel + GCN kernel + Gram kernel.
    x2, adj2, w2, b2 = _make_inputs(k2, 16, 160)
    out2 = jax.block_until_ready(
        structure_decoder(x2, adj2, w2, b2, dropout=0.3, training=False, seed=0))
    ref2 = _reference(x2, adj2, w2, b2)
    assert out2.shape == (16, 16)
    assert jnp.allclose(out2, ref2, atol=1e-2, rtol=1e-2), "mismatch (unfused path)"

    # Training-mode dropout is implemented in-kernel via the TPU PRNG; not exercised
    # here so the correctness check stays deterministic.
    print("KERNEL_OK")
</pallas_src>

<mosaic_0001>
module attributes {stable_mosaic.version = 11 : i64} {
  func.func @_gcn_fused_kernel(%arg0: i32, %arg1: i32, %arg2: memref<1xi32, #tpu.memory_space<smem>>, %arg3: memref<128x128xbf16, #tpu.memory_space<vmem>>, %arg4: memref<128x128xbf16, #tpu.memory_space<vmem>>, %arg5: memref<128x128xbf16, #tpu.memory_space<vmem>>, %arg6: memref<1x128xf32, #tpu.memory_space<vmem>>, %arg7: memref<128x128xbf16, #tpu.memory_space<vmem>>, %arg8: memref<128x128xf32, #tpu.memory_space<vmem>>) attributes {dimension_semantics = [#tpu.dimension_semantics<parallel>, #tpu.dimension_semantics<arbitrary>], iteration_bounds = array<i64: 1, 1>, scalar_prefetch = 1 : i64, scratch_operands = 1 : i64, tpu.core_type = #tpu.core_type<tc>, window_params = [{transform_indices = @transform_0, window_bounds = array<i64: 128, 128>}, {transform_indices = @transform_1, window_bounds = array<i64: 128, 128>}, {pipeline_mode = #tpu.pipeline_mode<synchronous>, transform_indices = @transform_2, window_bounds = array<i64: 128, 128>}, {pipeline_mode = #tpu.pipeline_mode<synchronous>, transform_indices = @transform_3, window_bounds = array<i64: 1, 128>}, {transform_indices = @transform_4, window_bounds = array<i64: 128, 128>}]} {
    %c0_i32 = arith.constant 0 : i32
    %0 = arith.cmpi eq, %arg1, %c0_i32 : i32
    %1 = arith.extui %0 : i1 to i32
    %c0_i32_0 = arith.constant 0 : i32
    %2 = arith.cmpi ne, %1, %c0_i32_0 : i32
    scf.if %2 {
      %cst_13 = arith.constant 0.000000e+00 : f32
      %15 = vector.broadcast %cst_13 : f32 to vector<128x128xf32>
      %c0_14 = arith.constant 0 : index
      %c0_15 = arith.constant 0 : index
      %16 = vector.load %arg8[%c0_14, %c0_15] : memref<128x128xf32, #tpu.memory_space<vmem>>, vector<128x128xf32>
      tpu.vector_store %arg8[%c0_14, %c0_15], %15 {strides = array<i32>} : memref<128x128xf32, #tpu.memory_space<vmem>>, vector<128x128xf32>,
    } else {
    }
    %c0 = arith.constant 0 : index
    %c0_1 = arith.constant 0 : index
    %3 = vector.load %arg4[%c0, %c0_1] : memref<128x128xbf16, #tpu.memory_space<vmem>>, vector<128x128xbf16>
    %c0_2 = arith.constant 0 : index
    %c0_3 = arith.constant 0 : index
    %4 = vector.load %arg5[%c0_2, %c0_3] : memref<128x128xbf16, #tpu.memory_space<vmem>>, vector<128x128xbf16>
    %cst = arith.constant dense<0.000000e+00> : vector<128x128xf32>
    %5 = tpu.matmul %3, %4, %cst {dimension_numbers = #tpu.dot_dimension_numbers<[1], [0], [0], [1], [0, 0, 1, 1], [], []>} : vector<128x128xbf16>, vector<128x128xbf16>, vector<128x128xf32> -> vector<128x128xf32>
    %6 = arith.truncf %5 : vector<128x128xf32> to vector<128x128xbf16>
    %c0_4 = arith.constant 0 : index
    %c0_5 = arith.constant 0 : index
    %7 = vector.load %arg8[%c0_4, %c0_5] : memref<128x128xf32, #tpu.memory_space<vmem>>, vector<128x128xf32>
    %c0_6 = arith.constant 0 : index
    %c0_7 = arith.constant 0 : index
    %8 = vector.load %arg3[%c0_6, %c0_7] : memref<128x128xbf16, #tpu.memory_space<vmem>>, vector<128x128xbf16>
    %cst_8 = arith.constant dense<0.000000e+00> : vector<128x128xf32>
    %9 = tpu.matmul %8, %6, %cst_8 {dimension_numbers = #tpu.dot_dimension_numbers<[1], [0], [0], [1], [0, 0, 1, 1], [], []>} : vector<128x128xbf16>, vector<128x128xbf16>, vector<128x128xf32> -> vector<128x128xf32>
    %10 = arith.addf %7, %9 : vector<128x128xf32>
    %c0_9 = arith.constant 0 : index
    %c0_10 = arith.constant 0 : index
    %11 = vector.load %arg8[%c0_9, %c0_10] : memref<128x128xf32, #tpu.memory_space<vmem>>, vector<128x128xf32>
    tpu.vector_store %arg8[%c0_9, %c0_10], %10 {strides = array<i32>} : memref<128x128xf32, #tpu.memory_space<vmem>>, vector<128x128xf32>,
    %c0_i32_11 = arith.constant 0 : i32
    %12 = arith.cmpi eq, %arg1, %c0_i32_11 : i32
    %13 = arith.extui %12 : i1 to i32
    %c0_i32_12 = arith.constant 0 : i32
    %14 = arith.cmpi ne, %13, %c0_i32_12 : i32
    scf.if %14 {
      %c0_13 = arith.constant 0 : index
      %c0_14 = arith.constant 0 : index
      %15 = vector.load %arg8[%c0_13, %c0_14] : memref<128x128xf32, #tpu.memory_space<vmem>>, vector<128x128xf32>
      %c0_15 = arith.constant 0 : index
      %c0_16 = arith.constant 0 : index
      %16 = vector.load %arg6[%c0_15, %c0_16] : memref<1x128xf32, #tpu.memory_space<vmem>>, vector<1x128xf32>
      %17 = vector.broadcast %16 : vector<1x128xf32> to vector<128x128xf32>
      %18 = arith.addf %15, %17 : vector<128x128xf32>
      %cst_17 = arith.constant 0.000000e+00 : f32
      %19 = vector.broadcast %cst_17 : f32 to vector<128x128xf32>
      %20 = arith.maximumf %18, %19 : vector<128x128xf32>
      %21 = arith.truncf %20 : vector<128x128xf32> to vector<128x128xbf16>
      %c0_18 = arith.constant 0 : index
      %c0_19 = arith.constant 0 : index
      %22 = vector.load %arg7[%c0_18, %c0_19] : memref<128x128xbf16, #tpu.memory_space<vmem>>, vector<128x128xbf16>
      tpu.vector_store %arg7[%c0_18, %c0_19], %21 {strides = array<i32>} : memref<128x128xbf16, #tpu.memory_space<vmem>>, vector<128x128xbf16>,
    } else {
    }
    return
  }
  func.func @transform_0(%arg0: i32, %arg1: i32, %arg2: memref<1xi32, #tpu.memory_space<smem>>) -> (i32, i32) {
    %c0_i32 = arith.constant 0 : i32
    return %arg0, %arg1 : i32, i32
  }
  func.func @transform_1(%arg0: i32, %arg1: i32, %arg2: memref<1xi32, #tpu.memory_space<smem>>) -> (i32, i32) {
    %c0_i32 = arith.constant 0 : i32
    %c0_i32_0 = arith.constant 0 : i32
    return %arg1, %c0_i32 : i32, i32
  }
  func.func @transform_2(%arg0: i32, %arg1: i32, %arg2: memref<1xi32, #tpu.memory_space<smem>>) -> (i32, i32) {
    %c0_i32 = arith.constant 0 : i32
    %c0_i32_0 = arith.constant 0 : i32
    %c0_i32_1 = arith.constant 0 : i32
    return %c0_i32, %c0_i32_0 : i32, i32
  }
  func.func @transform_3(%arg0: i32, %arg1: i32, %arg2: memref<1xi32, #tpu.memory_space<smem>>) -> (i32, i32) {
    %c0_i32 = arith.constant 0 : i32
    %c0_i32_0 = arith.constant 0 : i32
    %c0_i32_1 = arith.constant 0 : i32
    return %c0_i32, %c0_i32_0 : i32, i32
  }
  func.func @transform_4(%arg0: i32, %arg1: i32, %arg2: memref<1xi32, #tpu.memory_space<smem>>) -> (i32, i32) {
    %c0_i32 = arith.constant 0 : i32
    %c0_i32_0 = arith.constant 0 : i32
    return %arg0, %c0_i32 : i32, i32
  }
}

</mosaic_0001>

<llo_original>
// kernel: tpu_custom_call.1
$region0: #{tpu_custom_call.1}
  #allocation0 [shape = 'u32[]', space=smem, size = 0x4, offset = 0x4, fixed_abs, tag = 'smem constant byte address 0x4 - core index']
  #allocation1 [shape = 'u32[144,128]{1,0:T(1,128)}', space=vmem, size = 0x12000, scoped, tag = 'internal scratch']
  #allocation2 [shape = 'f32[128,128]{1,0:T(8,128)}', space=vmem, size = 0x10000, scoped, tag = 'scratch operand']
  #allocation3 [shape = 's32[1]{0}', space=sflag, size = 0x4, scoped, tag = 'scoped memory for tpu_custom_call.1']
  #allocation4 [shape = 's32[1]{0:T(128)S(6)}', space=smem, size = 0x200, scoped, tag = 'prefetched SMEM operand 0']
  %s0 = inlined_call_operand.<no memory space> [shape: s32[1], index: 0, kind: input, shape index: {}]
  %s1 = inlined_call_operand.hbm [shape: bf16[128,128], index: 1, kind: input, shape index: {}]
  %s2 = inlined_call_operand.hbm [shape: bf16[128,128], index: 2, kind: input, shape index: {}]
  %s3 = inlined_call_operand.hbm [shape: bf16[128,128], index: 3, kind: input, shape index: {}]
  %s4 = inlined_call_operand.vmem [shape: f32[1,128], index: 4, kind: input, shape index: {}]
  %s5 = inlined_call_operand.hbm [shape: bf16[128,128], index: 5, kind: output, shape index: {}]
  %s6 = sld [smem:[#allocation0]]
  $region46: #{tpu_custom_call.1} parent=0
    _
  %s8 = ssub.s32 1, %s6
  %s9 = scalar_select 0, %s8, %s6
  %10 = sst [smem:[#allocation4]] %s0
  $region1: #{tpu_custom_call.1} parent=0
    #allocation5 [shape = 'u8[32768]{0}', space=vmem, size = 0x8000, scoped, tag = 'input window, operand 1, single buffered']
    #allocation6 [shape = 's32[1]{0}', space=sflag, size = 0x4, scoped, tag = 'scoped memory for tpu_custom_call.1']
    #allocation7 [shape = 's32[1]{0}', space=sflag, size = 0x4, scoped, tag = 'scoped memory for tpu_custom_call.1']
    #allocation8 [shape = 'u8[32768]{0}', space=vmem, size = 0x8000, scoped, tag = 'input window, operand 2, single buffered']
    #allocation9 [shape = 's32[1]{0}', space=sflag, size = 0x4, scoped, tag = 'scoped memory for tpu_custom_call.1']
    #allocation10 [shape = 'u8[32768]{0}', space=vmem, size = 0x8000, scoped, tag = 'input window, operand 3, single buffered']
    #allocation11 [shape = 'u8[32768]{0}', space=vmem, size = 0x8000, scoped, tag = 'output window, operand 0, single buffered']
    %11 = vsyncpa [#allocation6], 0
    %12 = vsyncpa [#allocation9], 0
    %13 = vsyncpa [#allocation7], 0
    // Predicated region
    $region2: #{tpu_custom_call.1} parent=1 // pred_check
      _
    $region3: #{tpu_custom_call.1} parent=1 // pred_check_branch
      %15 = sbr.rel (0) target = $region5
    $region4: #{tpu_custom_call.1} parent=1 // pred_region
      %s17 = ssub.s32 1024, 1024
      %18 = vsyncadd [#allocation6], %s17
      %s19 = sshll.u32 [#allocation5], 4
      %s20 = int_to_ptr.vmem [resolvable:$true] %s19
      %25 = dma.hbm_to_vmem [thread:$0]  %s1, 1024, %s20, [#allocation6], 64, 64, 4
    $region5: #{tpu_custom_call.1} parent=1 // pred_fallthru
      _
    // Predicated region
    $region6: #{tpu_custom_call.1} parent=1 // pred_check
      _
    $region7: #{tpu_custom_call.1} parent=1 // pred_check_branch
      %27 = sbr.rel (0) target = $region9
    $region8: #{tpu_custom_call.1} parent=1 // pred_region
      %s29 = ssub.s32 1024, 1024
      %30 = vsyncadd [#allocation9], %s29
      %s31 = sshll.u32 [#allocation8], 4
      %s32 = int_to_ptr.vmem [resolvable:$true] %s31
      %37 = dma.hbm_to_vmem [thread:$0]  %s2, 1024, %s32, [#allocation9], 64, 64, 4
    $region9: #{tpu_custom_call.1} parent=1 // pred_fallthru
      _
    // Predicated region
    $region10: #{tpu_custom_call.1} parent=1 // pred_check
      _
    $region11: #{tpu_custom_call.1} parent=1 // pred_check_branch
      %39 = sbr.rel (0) target = $region13
    $region12: #{tpu_custom_call.1} parent=1 // pred_region
      %s41 = ssub.s32 1024, 1024
      %42 = vsyncadd [#allocation9], %s41
      %s43 = sshll.u32 [#allocation10], 4
      %s44 = int_to_ptr.vmem [resolvable:$true] %s43
      %49 = dma.hbm_to_vmem [thread:$0]  %s3, 1024, %s44, [#allocation9], 64, 64, 4
    $region13: #{tpu_custom_call.1} parent=1 // pred_fallthru
      _
    // Predicated region
    $region14: #{tpu_custom_call.1} parent=1 // pred_check
      _
    $region15: #{tpu_custom_call.1} parent=1 // pred_check_branch
      %51 = sbr.rel (0) target = $region17
    $region16: #{tpu_custom_call.1} parent=1 // pred_region
      _
    $region17: #{tpu_custom_call.1} parent=1 // pred_fallthru
      _
    // Predicated region
    $region18: #{tpu_custom_call.1} parent=1 // pred_check
      _
    $region19: #{tpu_custom_call.1} parent=1 // pred_check_branch
      %53 = sbr.rel (0) target = $region21
    $region20: #{tpu_custom_call.1} parent=1 // pred_region
      %54 = dma.done [#allocation6], 1024
    $region21: #{tpu_custom_call.1} parent=1 // pred_fallthru
      _
    // Predicated region
    $region22: #{tpu_custom_call.1} parent=1 // pred_check
      _
    $region23: #{tpu_custom_call.1} parent=1 // pred_check_branch
      %56 = sbr.rel (0) target = $region25
    $region24: #{tpu_custom_call.1} parent=1 // pred_region
      %57 = dma.done [#allocation9], 1024
    $region25: #{tpu_custom_call.1} parent=1 // pred_fallthru
      _
    // Predicated region
    $region26: #{tpu_custom_call.1} parent=1 // pred_check
      _
    $region27: #{tpu_custom_call.1} parent=1 // pred_check_branch
      %59 = sbr.rel (0) target = $region29
    $region28: #{tpu_custom_call.1} parent=1 // pred_region
      %60 = dma.done [#allocation9], 1024
    $region29: #{tpu_custom_call.1} parent=1 // pred_fallthru
      _
    %p62 = scmp.eq.s32.totalorder 0, 0
    // Predicated region
    $region30: #{tpu_custom_call.1} parent=1 // pred_check
      %p63 = pneg %p62
    $region31: #{tpu_custom_call.1} parent=1 // pred_check_branch
      %65 = sbr.rel (%p63) target = $region33
    $region32: #{tpu_custom_call.1} parent=1 // pred_region
      %66 = vst [vmem:[#allocation2] sm:$0xff] 0.0
      %67 = vst [vmem:[#allocation2 + $0x8] sm:$0xff] 0.0
      %68 = vst [vmem:[#allocation2 + $0x10] sm:$0xff] 0.0
      %69 = vst [vmem:[#allocation2 + $0x18] sm:$0xff] 0.0
      %70 = vst [vmem:[#allocation2 + $0x20] sm:$0xff] 0.0
      %71 = vst [vmem:[#allocation2 + $0x28] sm:$0xff] 0.0
      %72 = vst [vmem:[#allocation2 + $0x30] sm:$0xff] 0.0
      %73 = vst [vmem:[#allocation2 + $0x38] sm:$0xff] 0.0
      %74 = vst [vmem:[#allocation2 + $0x40] sm:$0xff] 0.0
      %75 = vst [vmem:[#allocation2 + $0x48] sm:$0xff] 0.0
      %76 = vst [vmem:[#allocation2 + $0x50] sm:$0xff] 0.0
      %77 = vst [vmem:[#allocation2 + $0x58] sm:$0xff] 0.0
      %78 = vst [vmem:[#allocation2 + $0x60] sm:$0xff] 0.0
      %79 = vst [vmem:[#allocation2 + $0x68] sm:$0xff] 0.0
      %80 = vst [vmem:[#allocation2 + $0x70] sm:$0xff] 0.0
      %81 = vst [vmem:[#allocation2 + $0x78] sm:$0xff] 0.0
    $region33: #{tpu_custom_call.1} parent=1 // pred_fallthru
      _
    %v82 = vld [vmem:[#allocation8] sm:$0xf]
    %v83 = vld [vmem:[#allocation8 + $0x4] sm:$0xf]
    %v84 = vld [vmem:[#allocation8 + $0x8] sm:$0xf]
    %v85 = vld [vmem:[#allocation8 + $0xc] sm:$0xf]
    %v86 = vld [vmem:[#allocation8 + $0x10] sm:$0xf]
    %v87 = vld [vmem:[#allocation8 + $0x14] sm:$0xf]
    %v88 = vld [vmem:[#allocation8 + $0x18] sm:$0xf]
    %v89 = vld [vmem:[#allocation8 + $0x1c] sm:$0xf]
    %v90 = vld [vmem:[#allocation8 + $0x20] sm:$0xf]
    %v91 = vld [vmem:[#allocation8 + $0x24] sm:$0xf]
    %v92 = vld [vmem:[#allocation8 + $0x28] sm:$0xf]
    %v93 = vld [vmem:[#allocation8 + $0x2c] sm:$0xf]
    %v94 = vld [vmem:[#allocation8 + $0x30] sm:$0xf]
    %v95 = vld [vmem:[#allocation8 + $0x34] sm:$0xf]
    %v96 = vld [vmem:[#allocation8 + $0x38] sm:$0xf]
    %v97 = vld [vmem:[#allocation8 + $0x3c] sm:$0xf]
    %v98 = vld [vmem:[#allocation10] sm:$0xf]
    %v99 = vld [vmem:[#allocation10 + $0x4] sm:$0xf]
    %v100 = vld [vmem:[#allocation10 + $0x8] sm:$0xf]
    %v101 = vld [vmem:[#allocation10 + $0xc] sm:$0xf]
    %v102 = vld [vmem:[#allocation10 + $0x10] sm:$0xf]
    %v103 = vld [vmem:[#allocation10 + $0x14] sm:$0xf]
    %v104 = vld [vmem:[#allocation10 + $0x18] sm:$0xf]
    %v105 = vld [vmem:[#allocation10 + $0x1c] sm:$0xf]
    %v106 = vld [vmem:[#allocation10 + $0x20] sm:$0xf]
    %v107 = vld [vmem:[#allocation10 + $0x24] sm:$0xf]
    %v108 = vld [vmem:[#allocation10 + $0x28] sm:$0xf]
    %v109 = vld [vmem:[#allocation10 + $0x2c] sm:$0xf]
    %v110 = vld [vmem:[#allocation10 + $0x30] sm:$0xf]
    %v111 = vld [vmem:[#allocation10 + $0x34] sm:$0xf]
    %v112 = vld [vmem:[#allocation10 + $0x38] sm:$0xf]
    %v113 = vld [vmem:[#allocation10 + $0x3c] sm:$0xf]
    %v130 = vunpack.c.l.b16 %v82
    %v131 = vunpack.c.l.b16 %v83
    %v132 = vunpack.c.l.b16 %v84
    %v133 = vunpack.c.l.b16 %v85
    %v134 = vunpack.c.l.b16 %v86
    %v135 = vunpack.c.l.b16 %v87
    %v136 = vunpack.c.l.b16 %v88
    %v137 = vunpack.c.l.b16 %v89
    %v138 = vunpack.c.l.b16 %v90
    %v139 = vunpack.c.l.b16 %v91
    %v140 = vunpack.c.l.b16 %v92
    %v141 = vunpack.c.l.b16 %v93
    %v142 = vunpack.c.l.b16 %v94
    %v143 = vunpack.c.l.b16 %v95
    %v144 = vunpack.c.l.b16 %v96
    %v145 = vunpack.c.l.b16 %v97
    %v146 = vpack.c.b16 %v131, %v130
    %v147 = vpack.c.b16 %v133, %v132
    %v148 = vpack.c.b16 %v135, %v134
    %v149 = vpack.c.b16 %v137, %v136
    %v150 = vpack.c.b16 %v139, %v138
    %v151 = vpack.c.b16 %v141, %v140
    %v152 = vpack.c.b16 %v143, %v142
    %v153 = vpack.c.b16 %v145, %v144
    %v178 = vunpack.c.l.b16 %v98
    %v179 = vunpack.c.l.b16 %v99
    %v180 = vunpack.c.l.b16 %v100
    %v181 = vunpack.c.l.b16 %v101
    %v182 = vunpack.c.l.b16 %v102
    %v183 = vunpack.c.l.b16 %v103
    %v184 = vunpack.c.l.b16 %v104
    %v185 = vunpack.c.l.b16 %v105
    %v186 = vunpack.c.l.b16 %v106
    %v187 = vunpack.c.l.b16 %v107
    %v188 = vunpack.c.l.b16 %v108
    %v189 = vunpack.c.l.b16 %v109
    %v190 = vunpack.c.l.b16 %v110
    %v191 = vunpack.c.l.b16 %v111
    %v192 = vunpack.c.l.b16 %v112
    %v193 = vunpack.c.l.b16 %v113
    %v194 = vpack.c.b16 %v179, %v178
    %v195 = vpack.c.b16 %v181, %v180
    %v196 = vpack.c.b16 %v183, %v182
    %v197 = vpack.c.b16 %v185, %v184
    %v198 = vpack.c.b16 %v187, %v186
    %v199 = vpack.c.b16 %v189, %v188
    %v200 = vpack.c.b16 %v191, %v190
    %v201 = vpack.c.b16 %v193, %v192
    %210 = vmatprep.subr.bf16.mxu0 0
    %211 = vmatpush1.bf16.msra.mxu0 %v201
    %212 = vmatprep.subr.bf16.mxu0 0
    %213 = vmatpush1.bf16.msra.mxu0 %v200
    %214 = vmatprep.subr.bf16.mxu0 0
    %215 = vmatpush1.bf16.msra.mxu0 %v199
    %216 = vmatprep.subr.bf16.mxu0 0
    %217 = vmatpush1.bf16.msra.mxu0 %v198
    %218 = vmatprep.subr.bf16.mxu0 0
    %219 = vmatpush1.bf16.msra.mxu0 %v197
    %220 = vmatprep.subr.bf16.mxu0 0
    %221 = vmatpush1.bf16.msra.mxu0 %v196
    %222 = vmatprep.subr.bf16.mxu0 0
    %223 = vmatpush1.bf16.msra.mxu0 %v195
    %224 = vmatprep.subr.bf16.mxu0 0
    %225 = vmatpush1.bf16.msra.mxu0 %v194
    %226 = vmatprep.subr.bf16.mxu0 0
    %227 = vmatpush2.bf16.msra.mxu0 0
    %228 = vmatprep.subr.bf16.mxu0 0
    %229 = vmatpush2.bf16.msra.mxu0 0
    %230 = vmatprep.subr.bf16.mxu0 0
    %231 = vmatpush2.bf16.msra.mxu0 0
    %232 = vmatprep.subr.bf16.mxu0 0
    %233 = vmatpush2.bf16.msra.mxu0 0
    %234 = vmatprep.subr.bf16.mxu0 0
    %235 = vmatpush2.bf16.msra.mxu0 0
    %236 = vmatprep.subr.bf16.mxu0 0
    %237 = vmatpush2.bf16.msra.mxu0 0
    %238 = vmatprep.subr.bf16.mxu0 0
    %239 = vmatpush2.bf16.msra.mxu0 0
    %240 = vmatprep.subr.bf16.mxu0 0
    %241 = vmatpush2.bf16.msra.mxu0 0
    %242 = vmatprep.mubr.bf16.mxu0 0
    %243 = vmatmul.mubr.bf16.gmra.mxu0 %v146
    %v244 = vpop.f32.mrf.mxu0
    %v245 = vadd.f32 0.0, %v244
    %v246 = vpop.f32.mrf.mxu0
    %v247 = vpop.f32.mrf.mxu0
    %v248 = vadd.f32 0.0, %v247
    %v249 = vpop.f32.mrf.mxu0
    %250 = vmatprep.mubr.bf16.mxu0 0
    %251 = vmatmul.mubr.bf16.gmra.mxu0 %v147
    %v252 = vpop.f32.mrf.mxu0
    %v253 = vadd.f32 0.0, %v252
    %v254 = vpop.f32.mrf.mxu0
    %v255 = vpop.f32.mrf.mxu0
    %v256 = vadd.f32 0.0, %v255
    %v257 = vpop.f32.mrf.mxu0
    %258 = vmatprep.mubr.bf16.mxu0 0
    %259 = vmatmul.mubr.bf16.gmra.mxu0 %v148
    %v260 = vpop.f32.mrf.mxu0
    %v261 = vadd.f32 0.0, %v260
    %v262 = vpop.f32.mrf.mxu0
    %v263 = vpop.f32.mrf.mxu0
    %v264 = vadd.f32 0.0, %v263
    %v265 = vpop.f32.mrf.mxu0
    %266 = vmatprep.mubr.bf16.mxu0 0
    %267 = vmatmul.mubr.bf16.gmra.mxu0 %v149
    %v268 = vpop.f32.mrf.mxu0
    %v269 = vadd.f32 0.0, %v268
    %v270 = vpop.f32.mrf.mxu0
    %v271 = vpop.f32.mrf.mxu0
    %v272 = vadd.f32 0.0, %v271
    %v273 = vpop.f32.mrf.mxu0
    %274 = vmatprep.mubr.bf16.mxu0 0
    %275 = vmatmul.mubr.bf16.gmra.mxu0 %v150
    %v276 = vpop.f32.mrf.mxu0
    %v277 = vadd.f32 0.0, %v276
    %v278 = vpop.f32.mrf.mxu0
    %v279 = vpop.f32.mrf.mxu0
    %v280 = vadd.f32 0.0, %v279
    %v281 = vpop.f32.mrf.mxu0
    %282 = vmatprep.mubr.bf16.mxu0 0
    %283 = vmatmul.mubr.bf16.gmra.mxu0 %v151
    %v284 = vpop.f32.mrf.mxu0
    %v285 = vadd.f32 0.0, %v284
    %v286 = vpop.f32.mrf.mxu0
    %v287 = vpop.f32.mrf.mxu0
    %v288 = vadd.f32 0.0, %v287
    %v289 = vpop.f32.mrf.mxu0
    %290 = vmatprep.mubr.bf16.mxu0 0
    %291 = vmatmul.mubr.bf16.gmra.mxu0 %v152
    %v292 = vpop.f32.mrf.mxu0
    %v293 = vadd.f32 0.0, %v292
    %v294 = vpop.f32.mrf.mxu0
    %v295 = vpop.f32.mrf.mxu0
    %v296 = vadd.f32 0.0, %v295
    %v297 = vpop.f32.mrf.mxu0
    %298 = vmatprep.mubr.bf16.mxu0 0
    %299 = vmatmul.mubr.bf16.gmra.mxu0 %v153
    %v300 = vpop.f32.mrf.mxu0
    %v301 = vadd.f32 0.0, %v300
    %v302 = vpop.f32.mrf.mxu0
    %v303 = vpop.f32.mrf.mxu0
    %v304 = vadd.f32 0.0, %v303
    %v305 = vpop.f32.mrf.mxu0
    %306 = vdwg.mxu0
    %v307 = vpack.c.bf16 %v248, %v245
    %v308 = vpack.c.bf16 %v256, %v253
    %v309 = vpack.c.bf16 %v264, %v261
    %v310 = vpack.c.bf16 %v272, %v269
    %v311 = vpack.c.bf16 %v280, %v277
    %v312 = vpack.c.bf16 %v288, %v285
    %v313 = vpack.c.bf16 %v296, %v293
    %v314 = vpack.c.bf16 %v304, %v301
    %v315 = vld [vmem:[#allocation2] sm:$0xff]
    %v316 = vld [vmem:[#allocation2 + $0x8] sm:$0xff]
    %v317 = vld [vmem:[#allocation2 + $0x10] sm:$0xff]
    %v318 = vld [vmem:[#allocation2 + $0x18] sm:$0xff]
    %v319 = vld [vmem:[#allocation2 + $0x20] sm:$0xff]
    %v320 = vld [vmem:[#allocation2 + $0x28] sm:$0xff]
    %v321 = vld [vmem:[#allocation2 + $0x30] sm:$0xff]
    %v322 = vld [vmem:[#allocation2 + $0x38] sm:$0xff]
    %v323 = vld [vmem:[#allocation2 + $0x40] sm:$0xff]
    %v324 = vld [vmem:[#allocation2 + $0x48] sm:$0xff]
    %v325 = vld [vmem:[#allocation2 + $0x50] sm:$0xff]
    %v326 = vld [vmem:[#allocation2 + $0x58] sm:$0xff]
    %v327 = vld [vmem:[#allocation2 + $0x60] sm:$0xff]
    %v328 = vld [vmem:[#allocation2 + $0x68] sm:$0xff]
    %v329 = vld [vmem:[#allocation2 + $0x70] sm:$0xff]
    %v330 = vld [vmem:[#allocation2 + $0x78] sm:$0xff]
    %v331 = vld [vmem:[#allocation5] sm:$0xf]
    %v332 = vld [vmem:[#allocation5 + $0x4] sm:$0xf]
    %v333 = vld [vmem:[#allocation5 + $0x8] sm:$0xf]
    %v334 = vld [vmem:[#allocation5 + $0xc] sm:$0xf]
    %v335 = vld [vmem:[#allocation5 + $0x10] sm:$0xf]
    %v336 = vld [vmem:[#allocation5 + $0x14] sm:$0xf]
    %v337 = vld [vmem:[#allocation5 + $0x18] sm:$0xf]
    %v338 = vld [vmem:[#allocation5 + $0x1c] sm:$0xf]
    %v339 = vld [vmem:[#allocation5 + $0x20] sm:$0xf]
    %v340 = vld [vmem:[#allocation5 + $0x24] sm:$0xf]
    %v341 = vld [vmem:[#allocation5 + $0x28] sm:$0xf]
    %v342 = vld [vmem:[#allocation5 + $0x2c] sm:$0xf]
    %v343 = vld [vmem:[#allocation5 + $0x30] sm:$0xf]
    %v344 = vld [vmem:[#allocation5 + $0x34] sm:$0xf]
    %v345 = vld [vmem:[#allocation5 + $0x38] sm:$0xf]
    %v346 = vld [vmem:[#allocation5 + $0x3c] sm:$0xf]
    %v363 = vunpack.c.l.b16 %v331
    %v364 = vunpack.c.l.b16 %v332
    %v365 = vunpack.c.l.b16 %v333
    %v366 = vunpack.c.l.b16 %v334
    %v367 = vunpack.c.l.b16 %v335
    %v368 = vunpack.c.l.b16 %v336
    %v369 = vunpack.c.l.b16 %v337
    %v370 = vunpack.c.l.b16 %v338
    %v371 = vunpack.c.l.b16 %v339
    %v372 = vunpack.c.l.b16 %v340
    %v373 = vunpack.c.l.b16 %v341
    %v374 = vunpack.c.l.b16 %v342
    %v375 = vunpack.c.l.b16 %v343
    %v376 = vunpack.c.l.b16 %v344
    %v377 = vunpack.c.l.b16 %v345
    %v378 = vunpack.c.l.b16 %v346
    %v379 = vpack.c.b16 %v364, %v363
    %v380 = vpack.c.b16 %v366, %v365
    %v381 = vpack.c.b16 %v368, %v367
    %v382 = vpack.c.b16 %v370, %v369
    %v383 = vpack.c.b16 %v372, %v371
    %v384 = vpack.c.b16 %v374, %v373
    %v385 = vpack.c.b16 %v376, %v375
    %v386 = vpack.c.b16 %v378, %v377
    %395 = vmatprep.subr.bf16.mxu0 0
    %396 = vmatpush1.bf16.msra.mxu0 %v314
    %397 = vmatprep.subr.bf16.mxu0 0
    %398 = vmatpush1.bf16.msra.mxu0 %v313
    %399 = vmatprep.subr.bf16.mxu0 0
    %400 = vmatpush1.bf16.msra.mxu0 %v312
    %401 = vmatprep.subr.bf16.mxu0 0
    %402 = vmatpush1.bf16.msra.mxu0 %v311
    %403 = vmatprep.subr.bf16.mxu0 0
    %404 = vmatpush1.bf16.msra.mxu0 %v310
    %405 = vmatprep.subr.bf16.mxu0 0
    %406 = vmatpush1.bf16.msra.mxu0 %v309
    %407 = vmatprep.subr.bf16.mxu0 0
    %408 = vmatpush1.bf16.msra.mxu0 %v308
    %409 = vmatprep.subr.bf16.mxu0 0
    %410 = vmatpush1.bf16.msra.mxu0 %v307
    %411 = vmatprep.subr.bf16.mxu0 0
    %412 = vmatpush2.bf16.msra.mxu0 0
    %413 = vmatprep.subr.bf16.mxu0 0
    %414 = vmatpush2.bf16.msra.mxu0 0
    %415 = vmatprep.subr.bf16.mxu0 0
    %416 = vmatpush2.bf16.msra.mxu0 0
    %417 = vmatprep.subr.bf16.mxu0 0
    %418 = vmatpush2.bf16.msra.mxu0 0
    %419 = vmatprep.subr.bf16.mxu0 0
    %420 = vmatpush2.bf16.msra.mxu0 0
    %421 = vmatprep.subr.bf16.mxu0 0
    %422 = vmatpush2.bf16.msra.mxu0 0
    %423 = vmatprep.subr.bf16.mxu0 0
    %424 = vmatpush2.bf16.msra.mxu0 0
    %425 = vmatprep.subr.bf16.mxu0 0
    %426 = vmatpush2.bf16.msra.mxu0 0
    %427 = vmatprep.mubr.bf16.mxu0 0
    %428 = vmatmul.mubr.bf16.gmra.mxu0 %v379
    %v429 = vpop.f32.mrf.mxu0
    %v430 = vadd.f32 0.0, %v429
    %v431 = vpop.f32.mrf.mxu0
    %v432 = vpop.f32.mrf.mxu0
    %v433 = vadd.f32 0.0, %v432
    %v434 = vpop.f32.mrf.mxu0
    %435 = vmatprep.mubr.bf16.mxu0 0
    %436 = vmatmul.mubr.bf16.gmra.mxu0 %v380
    %v437 = vpop.f32.mrf.mxu0
    %v438 = vadd.f32 0.0, %v437
    %v439 = vpop.f32.mrf.mxu0
    %v440 = vpop.f32.mrf.mxu0
    %v441 = vadd.f32 0.0, %v440
    %v442 = vpop.f32.mrf.mxu0
    %443 = vmatprep.mubr.bf16.mxu0 0
    %444 = vmatmul.mubr.bf16.gmra.mxu0 %v381
    %v445 = vpop.f32.mrf.mxu0
    %v446 = vadd.f32 0.0, %v445
    %v447 = vpop.f32.mrf.mxu0
    %v448 = vpop.f32.mrf.mxu0
    %v449 = vadd.f32 0.0, %v448
    %v450 = vpop.f32.mrf.mxu0
    %451 = vmatprep.mubr.bf16.mxu0 0
    %452 = vmatmul.mubr.bf16.gmra.mxu0 %v382
    %v453 = vpop.f32.mrf.mxu0
    %v454 = vadd.f32 0.0, %v453
    %v455 = vpop.f32.mrf.mxu0
    %v456 = vpop.f32.mrf.mxu0
    %v457 = vadd.f32 0.0, %v456
    %v458 = vpop.f32.mrf.mxu0
    %459 = vmatprep.mubr.bf16.mxu0 0
    %460 = vmatmul.mubr.bf16.gmra.mxu0 %v383
    %v461 = vpop.f32.mrf.mxu0
    %v462 = vadd.f32 0.0, %v461
    %v463 = vpop.f32.mrf.mxu0
    %v464 = vpop.f32.mrf.mxu0
    %v465 = vadd.f32 0.0, %v464
    %v466 = vpop.f32.mrf.mxu0
    %467 = vmatprep.mubr.bf16.mxu0 0
    %468 = vmatmul.mubr.bf16.gmra.mxu0 %v384
    %v469 = vpop.f32.mrf.mxu0
    %v470 = vadd.f32 0.0, %v469
    %v471 = vpop.f32.mrf.mxu0
    %v472 = vpop.f32.mrf.mxu0
    %v473 = vadd.f32 0.0, %v472
    %v474 = vpop.f32.mrf.mxu0
    %475 = vmatprep.mubr.bf16.mxu0 0
    %476 = vmatmul.mubr.bf16.gmra.mxu0 %v385
    %v477 = vpop.f32.mrf.mxu0
    %v478 = vadd.f32 0.0, %v477
    %v479 = vpop.f32.mrf.mxu0
    %v480 = vpop.f32.mrf.mxu0
    %v481 = vadd.f32 0.0, %v480
    %v482 = vpop.f32.mrf.mxu0
    %483 = vmatprep.mubr.bf16.mxu0 0
    %484 = vmatmul.mubr.bf16.gmra.mxu0 %v386
    %v485 = vpop.f32.mrf.mxu0
    %v486 = vadd.f32 0.0, %v485
    %v487 = vpop.f32.mrf.mxu0
    %v488 = vpop.f32.mrf.mxu0
    %v489 = vadd.f32 0.0, %v488
    %v490 = vpop.f32.mrf.mxu0
    %491 = vdwg.mxu0
    %v492 = vadd.f32 %v315, %v430
    %v493 = vadd.f32 %v316, %v433
    %v494 = vadd.f32 %v317, %v438
    %v495 = vadd.f32 %v318, %v441
    %v496 = vadd.f32 %v319, %v446
    %v497 = vadd.f32 %v320, %v449
    %v498 = vadd.f32 %v321, %v454
    %v499 = vadd.f32 %v322, %v457
    %v500 = vadd.f32 %v323, %v462
    %v501 = vadd.f32 %v324, %v465
    %v502 = vadd.f32 %v325, %v470
    %v503 = vadd.f32 %v326, %v473
    %v504 = vadd.f32 %v327, %v478
    %v505 = vadd.f32 %v328, %v481
    %v506 = vadd.f32 %v329, %v486
    %v507 = vadd.f32 %v330, %v489
    %508 = vst [vmem:[#allocation2] sm:$0xff] %v492
    %509 = vst [vmem:[#allocation2 + $0x8] sm:$0xff] %v493
    %510 = vst [vmem:[#allocation2 + $0x10] sm:$0xff] %v494
    %511 = vst [vmem:[#allocation2 + $0x18] sm:$0xff] %v495
    %512 = vst [vmem:[#allocation2 + $0x20] sm:$0xff] %v496
    %513 = vst [vmem:[#allocation2 + $0x28] sm:$0xff] %v497
    %514 = vst [vmem:[#allocation2 + $0x30] sm:$0xff] %v498
    %515 = vst [vmem:[#allocation2 + $0x38] sm:$0xff] %v499
    %516 = vst [vmem:[#allocation2 + $0x40] sm:$0xff] %v500
    %517 = vst [vmem:[#allocation2 + $0x48] sm:$0xff] %v501
    %518 = vst [vmem:[#allocation2 + $0x50] sm:$0xff] %v502
    %519 = vst [vmem:[#allocation2 + $0x58] sm:$0xff] %v503
    %520 = vst [vmem:[#allocation2 + $0x60] sm:$0xff] %v504
    %521 = vst [vmem:[#allocation2 + $0x68] sm:$0xff] %v505
    %522 = vst [vmem:[#allocation2 + $0x70] sm:$0xff] %v506
    %523 = vst [vmem:[#allocation2 + $0x78] sm:$0xff] %v507
    // Predicated region
    $region34: #{tpu_custom_call.1} parent=1 // pred_check
      %p524 = pneg %p62
    $region35: #{tpu_custom_call.1} parent=1 // pred_check_branch
      %526 = sbr.rel (%p524) target = $region37
    $region36: #{tpu_custom_call.1} parent=1 // pred_region
      %v527 = vld [vmem:[#allocation2] sm:$0xff]
      %v528 = vld [vmem:[#allocation2 + $0x8] sm:$0xff]
      %v529 = vld [vmem:[#allocation2 + $0x10] sm:$0xff]
      %v530 = vld [vmem:[#allocation2 + $0x18] sm:$0xff]
      %v531 = vld [vmem:[#allocation2 + $0x20] sm:$0xff]
      %v532 = vld [vmem:[#allocation2 + $0x28] sm:$0xff]
      %v533 = vld [vmem:[#allocation2 + $0x30] sm:$0xff]
      %v534 = vld [vmem:[#allocation2 + $0x38] sm:$0xff]
      %v535 = vld [vmem:[#allocation2 + $0x40] sm:$0xff]
      %v536 = vld [vmem:[#allocation2 + $0x48] sm:$0xff]
      %v537 = vld [vmem:[#allocation2 + $0x50] sm:$0xff]
      %v538 = vld [vmem:[#allocation2 + $0x58] sm:$0xff]
      %v539 = vld [vmem:[#allocation2 + $0x60] sm:$0xff]
      %v540 = vld [vmem:[#allocation2 + $0x68] sm:$0xff]
      %v541 = vld [vmem:[#allocation2 + $0x70] sm:$0xff]
      %v542 = vld [vmem:[#allocation2 + $0x78] sm:$0xff]
      %v543 = vld [vmem:[%s4] sm:$0x1]
      %v545 = vlaneseq
      %v546 = vshrl.u32 %v545, 7
      %v547 = vsub.s32 0, %v546
      %v548 = vrot.slane %v543, %v547
      %v550 = vadd.f32 %v527, %v548
      %v551 = vadd.f32 %v528, %v548
      %v552 = vadd.f32 %v529, %v548
      %v553 = vadd.f32 %v530, %v548
      %v554 = vadd.f32 %v531, %v548
      %v555 = vadd.f32 %v532, %v548
      %v556 = vadd.f32 %v533, %v548
      %v557 = vadd.f32 %v534, %v548
      %v558 = vadd.f32 %v535, %v548
      %v559 = vadd.f32 %v536, %v548
      %v560 = vadd.f32 %v537, %v548
      %v561 = vadd.f32 %v538, %v548
      %v562 = vadd.f32 %v539, %v548
      %v563 = vadd.f32 %v540, %v548
      %v564 = vadd.f32 %v541, %v548
      %v565 = vadd.f32 %v542, %v548
      %v566 = vmax.f32 %v550, 0.0
      %v567 = vmax.f32 %v551, 0.0
      %v568 = vmax.f32 %v552, 0.0
      %v569 = vmax.f32 %v553, 0.0
      %v570 = vmax.f32 %v554, 0.0
      %v571 = vmax.f32 %v555, 0.0
      %v572 = vmax.f32 %v556, 0.0
      %v573 = vmax.f32 %v557, 0.0
      %v574 = vmax.f32 %v558, 0.0
      %v575 = vmax.f32 %v559, 0.0
      %v576 = vmax.f32 %v560, 0.0
      %v577 = vmax.f32 %v561, 0.0
      %v578 = vmax.f32 %v562, 0.0
      %v579 = vmax.f32 %v563, 0.0
      %v580 = vmax.f32 %v564, 0.0
      %v581 = vmax.f32 %v565, 0.0
      %v582 = vpack.c.bf16 %v567, %v566
      %v583 = vpack.c.bf16 %v569, %v568
      %v584 = vpack.c.bf16 %v571, %v570
      %v585 = vpack.c.bf16 %v573, %v572
      %v586 = vpack.c.bf16 %v575, %v574
      %v587 = vpack.c.bf16 %v577, %v576
      %v588 = vpack.c.bf16 %v579, %v578
      %v589 = vpack.c.bf16 %v581, %v580
      %v598 = vunpack.c.l.b16 %v582
      %v599 = vunpack.c.h.b16 %v582
      %v600 = vunpack.c.l.b16 %v583
      %v601 = vunpack.c.h.b16 %v583
      %v602 = vunpack.c.l.b16 %v584
      %v603 = vunpack.c.h.b16 %v584
      %v604 = vunpack.c.l.b16 %v585
      %v605 = vunpack.c.h.b16 %v585
      %v606 = vunpack.c.l.b16 %v586
      %v607 = vunpack.c.h.b16 %v586
      %v608 = vunpack.c.l.b16 %v587
      %v609 = vunpack.c.h.b16 %v587
      %v610 = vunpack.c.l.b16 %v588
      %v611 = vunpack.c.h.b16 %v588
      %v612 = vunpack.c.l.b16 %v589
      %v613 = vunpack.c.h.b16 %v589
      %v614 = vpack.c.b16 %v598, %v598
      %v615 = vpack.c.b16 %v599, %v599
      %v616 = vpack.c.b16 %v600, %v600
      %v617 = vpack.c.b16 %v601, %v601
      %v618 = vpack.c.b16 %v602, %v602
      %v619 = vpack.c.b16 %v603, %v603
      %v620 = vpack.c.b16 %v604, %v604
      %v621 = vpack.c.b16 %v605, %v605
      %v622 = vpack.c.b16 %v606, %v606
      %v623 = vpack.c.b16 %v607, %v607
      %v624 = vpack.c.b16 %v608, %v608
      %v625 = vpack.c.b16 %v609, %v609
      %v626 = vpack.c.b16 %v610, %v610
      %v627 = vpack.c.b16 %v611, %v611
      %v628 = vpack.c.b16 %v612, %v612
      %v629 = vpack.c.b16 %v613, %v613
      %646 = vst [vmem:[#allocation11] sm:$0xf] %v614
      %647 = vst [vmem:[#allocation11 + $0x4] sm:$0xf] %v615
      %648 = vst [vmem:[#allocation11 + $0x8] sm:$0xf] %v616
      %649 = vst [vmem:[#allocation11 + $0xc] sm:$0xf] %v617
      %650 = vst [vmem:[#allocation11 + $0x10] sm:$0xf] %v618
      %651 = vst [vmem:[#allocation11 + $0x14] sm:$0xf] %v619
      %652 = vst [vmem:[#allocation11 + $0x18] sm:$0xf] %v620
      %653 = vst [vmem:[#allocation11 + $0x1c] sm:$0xf] %v621
      %654 = vst [vmem:[#allocation11 + $0x20] sm:$0xf] %v622
      %655 = vst [vmem:[#allocation11 + $0x24] sm:$0xf] %v623
      %656 = vst [vmem:[#allocation11 + $0x28] sm:$0xf] %v624
      %657 = vst [vmem:[#allocation11 + $0x2c] sm:$0xf] %v625
      %658 = vst [vmem:[#allocation11 + $0x30] sm:$0xf] %v626
      %659 = vst [vmem:[#allocation11 + $0x34] sm:$0xf] %v627
      %660 = vst [vmem:[#allocation11 + $0x38] sm:$0xf] %v628
      %661 = vst [vmem:[#allocation11 + $0x3c] sm:$0xf] %v629
    $region37: #{tpu_custom_call.1} parent=1 // pred_fallthru
      _
    // Predicated region
    $region38: #{tpu_custom_call.1} parent=1 // pred_check
      _
    $region39: #{tpu_custom_call.1} parent=1 // pred_check_branch
      %663 = sbr.rel (0) target = $region41
    $region40: #{tpu_custom_call.1} parent=1 // pred_region
      %s665 = ssub.s32 1024, 1024
      %666 = vsyncadd [#allocation7], %s665
      %s667 = sshll.u32 [#allocation11], 4
      %s668 = int_to_ptr.vmem [resolvable:$true] %s667
      %673 = dma.vmem_to_hbm [thread:$0]  %s668, 1024, %s5, [#allocation7], 64, 64, 4
    $region41: #{tpu_custom_call.1} parent=1 // pred_fallthru
      _
    // Predicated region
    $region42: #{tpu_custom_call.1} parent=1 // pred_check
      _
    $region43: #{tpu_custom_call.1} parent=1 // pred_check_branch
      %675 = sbr.rel (0) target = $region45
    $region44: #{tpu_custom_call.1} parent=1 // pred_region
      %676 = dma.done [#allocation7], 1024
    $region45: #{tpu_custom_call.1} parent=1 // pred_fallthru
      _
    %677 = vsyncpa [#allocation6], 1
    %678 = vsyncpa [#allocation9], 1
    %679 = vsyncpa [#allocation7], 1

</llo_original>
